<compile_context>
chip_gen: v7x
topology: tpu7x:2x2x1
jax: 0.10.0
libtpu: 0.0.40
codegen_flags: <defaults>
</compile_context>

<pallas_src>
import functools

import jax
import jax.numpy as jnp
from jax.experimental import pallas as pl
from jax.experimental.pallas import tpu as pltpu

LN_EPS = 1e-5


def _round_up(x, m):
    return (x + m - 1) // m * m


def _patch_merge_kernel(x_ref, w_ref, b_ref, o_ref):
    # x_ref: (tm, 4C)   merged tokens
    # w_ref: (4C, 2Cp)  reduction weight with LN gamma folded in (lane-padded)
    # b_ref: (1, 2Cp)   beta @ W  (f32, lane-padded)
    # o_ref: (tm, 2Cp)
    x = x_ref[...]
    xf = x.astype(jnp.float32)

    # LayerNorm statistics: single pass (mean, E[x^2]); biased variance like
    # torch.nn.LayerNorm.
    mean = jnp.mean(xf, axis=-1, keepdims=True)
    m2 = jnp.mean(xf * xf, axis=-1, keepdims=True)
    var = jnp.maximum(m2 - mean * mean, 0.0)
    inv = jax.lax.rsqrt(var + LN_EPS)

    # Normalised activations back in the input dtype -> native MXU path
    # (bf16 x bf16 -> f32 acc) when activations are bf16.
    xn = ((xf - mean) * inv).astype(x_ref.dtype)

    acc = jnp.dot(xn, w_ref[...], preferred_element_type=jnp.float32)
    o_ref[...] = (acc + b_ref[...]).astype(o_ref.dtype)


def patch_merging_forward(x, H, W, gamma, beta, w_t, *, tm=256):
    """x: (B, H*W, C); gamma/beta: (4C,); w_t: (4C, 2C) = torch_weight.T
    Returns (B, ceil(H/2)*ceil(W/2), 2C)."""
    B, L, C = x.shape
    assert L == H * W, "input feature has wrong size"
    C4, C2 = 4 * C, 2 * C
    dtype = x.dtype

    # ---- 2x2 neighbour gather (layout plumbing; fusion-friendly form) ------
    x4 = x.reshape(B, H, W, C)
    if (H % 2 == 1) or (W % 2 == 1):  # matches F.pad(x, (0,0,0,W%2,0,H%2))
        x4 = jnp.pad(x4, ((0, 0), (0, H % 2), (0, W % 2), (0, 0)))
    Hp, Wp = x4.shape[1], x4.shape[2]
    Hn, Wn = Hp // 2, Wp // 2
    # (B, Hn, hp, Wn, wp, C) -> (B, Hn, Wn, wp, hp, C) -> (N, 4C)
    # Channel block j = 2*wp + hp reproduces torch.cat([x0, x1, x2, x3], -1).
    xm = (x4.reshape(B, Hn, 2, Wn, 2, C)
             .transpose(0, 1, 3, 4, 2, 5)
             .reshape(B * Hn * Wn, C4))
    N = B * Hn * Wn

    # ---- fold LayerNorm affine into the reduction weight --------------------
    w32 = w_t.astype(jnp.float32)
    g32 = gamma.astype(jnp.float32)
    b32 = beta.astype(jnp.float32)
    wp_full = w32 * g32[:, None]            # (4C, 2C)
    bp_full = (b32 @ w32)[None, :]          # (1, 2C), stays f32

    # ---- lane-dense output: pad 2C up to a multiple of 128 -------------------
    C2p = _round_up(C2, 128)
    if C2p != C2:
        wp_full = jnp.pad(wp_full, ((0, 0), (0, C2p - C2)))
        bp_full = jnp.pad(bp_full, ((0, 0), (0, C2p - C2)))
    wp = wp_full.astype(dtype)              # matmul RHS in the activation dtype
    bp = bp_full                            # f32 bias added after the MXU

    # ---- row tiling: big tiles, clamped by N and a conservative VMEM budget --
    itm = jnp.dtype(dtype).itemsize
    tm = max(8, min(int(tm), _round_up(N, 8)))
    tm = _round_up(tm, 8)

    def _vmem_bytes(t):
        # double-buffered input/output blocks + (double-buffered) weight + bias
        return (2 * t * C4 * itm + 2 * t * C2p * itm
                + 2 * C4 * C2p * itm + 2 * C2p * 4 + (1 << 20))
    # TODO(synk): single-buffer the weight (pl.Buffered) once stable; for real
    # Swin sizes the double-buffered weight is the main VMEM consumer.
    budget = 24 * 1024 * 1024               # fits v7x's 32 MiB scoped default
    while tm > 8 and _vmem_bytes(tm) > budget:
        tm = _round_up(tm // 2, 8)

    Np = _round_up(N, tm)
    if Np != N:
        xm = jnp.pad(xm, ((0, Np - N), (0, 0)))
    grid = Np // tm

    vmem_limit = int(min(max(_vmem_bytes(tm) + (8 << 20), 32 << 20), 48 << 20))
    cost = pl.CostEstimate(
        flops=2 * Np * C4 * C2p,
        transcendentals=Np,
        bytes_accessed=Np * C4 * itm + Np * C2p * itm + C4 * C2p * itm + C2p * 4,
    )

    out = pl.pallas_call(
        _patch_merge_kernel,
        out_shape=jax.ShapeDtypeStruct((Np, C2p), dtype),
        grid_spec=pltpu.PrefetchScalarGridSpec(
            num_scalar_prefetch=0,
            grid=(grid,),
            in_specs=[
                pl.BlockSpec((tm, C4), lambda i: (i, 0)),
                pl.BlockSpec((C4, C2p), lambda i: (0, 0)),
                pl.BlockSpec((1, C2p), lambda i: (0, 0)),
            ],
            out_specs=pl.BlockSpec((tm, C2p), lambda i: (i, 0)),
        ),
        compiler_params=pltpu.CompilerParams(
            dimension_semantics=("parallel",),
            vmem_limit_bytes=vmem_limit,
            # let XLA fuse the gather / pad producer into the input pipeline
            allow_input_fusion=[True, False, False],
        ),
        cost_estimate=cost,
    )(xm, wp, bp)

    out = out[:N, :C2]
    return out.reshape(B, Hn * Wn, C2)


def _reference(x, H, W, gamma, beta, w_t):
    """Pure-JAX reference matching the PyTorch module (unfolded LN affine)."""
    B, L, C = x.shape
    x4 = x.reshape(B, H, W, C)
    if (H % 2 == 1) or (W % 2 == 1):
        x4 = jnp.pad(x4, ((0, 0), (0, H % 2), (0, W % 2), (0, 0)))
    x0 = x4[:, 0::2, 0::2, :]
    x1 = x4[:, 1::2, 0::2, :]
    x2 = x4[:, 0::2, 1::2, :]
    x3 = x4[:, 1::2, 1::2, :]
    xm = jnp.concatenate([x0, x1, x2, x3], axis=-1).reshape(B, -1, 4 * C)
    mean = jnp.mean(xm, axis=-1, keepdims=True)
    var = jnp.mean((xm - mean) ** 2, axis=-1, keepdims=True)
    xn = (xm - mean) * jax.lax.rsqrt(var + LN_EPS) * gamma + beta
    return jnp.einsum("blk,kn->bln", xn, w_t)


if __name__ == "__main__":
    key = jax.random.PRNGKey(0)
    kx, kw, kg, kb = jax.random.split(key, 4)

    def run_case(B, H, W, C, tm):
        x = jax.random.normal(kx, (B, H * W, C), dtype=jnp.float32)
        gamma = 1.0 + 0.1 * jax.random.normal(kg, (4 * C,), dtype=jnp.float32)
        beta = 0.05 * jax.random.normal(kb, (4 * C,), dtype=jnp.float32)
        # torch weight shape is (2C, 4C); kernel uses its transpose (4C, 2C)
        w_torch = jax.random.normal(kw, (2 * C, 4 * C), dtype=jnp.float32) * 0.02
        w_t = w_torch.T

        fwd = jax.jit(functools.partial(patch_merging_forward, tm=tm),
                      static_argnums=(1, 2))
        out = jax.block_until_ready(fwd(x, H, W, gamma, beta, w_t))
        ref = _reference(x, H, W, gamma, beta, w_t)
        assert out.shape == ref.shape, (out.shape, ref.shape)
        err = float(jnp.max(jnp.abs(out - ref)))
        assert jnp.allclose(out, ref, atol=2e-4, rtol=2e-4), f"max abs err {err}"

    run_case(2, 16, 16, 32, 256)   # even H/W; 2C=64 -> lane-padded output
    run_case(2, 16, 16, 64, 64)    # multi-step grid (megacore-shardable)
    run_case(1, 7, 9, 32, 256)     # odd H/W padding path
    print("KERNEL_OK")
</pallas_src>

<mosaic_0001>
module attributes {stable_mosaic.version = 11 : i64} {
  func.func @_patch_merge_kernel(%arg0: i32, %arg1: memref<128x128xf32, #tpu.memory_space<vmem>>, %arg2: memref<128x128xf32, #tpu.memory_space<vmem>>, %arg3: memref<1x128xf32, #tpu.memory_space<vmem>>, %arg4: memref<128x128xf32, #tpu.memory_space<vmem>>) attributes {dimension_semantics = [#tpu.dimension_semantics<parallel>], iteration_bounds = array<i64: 1>, scalar_prefetch = 0 : i64, scratch_operands = 0 : i64, tpu.core_type = #tpu.core_type<tc>, window_params = [{transform_indices = @transform_0, window_bounds = array<i64: 128, 128>}, {pipeline_mode = #tpu.pipeline_mode<synchronous>, transform_indices = @transform_1, window_bounds = array<i64: 128, 128>}, {pipeline_mode = #tpu.pipeline_mode<synchronous>, transform_indices = @transform_2, window_bounds = array<i64: 1, 128>}, {transform_indices = @transform_3, window_bounds = array<i64: 128, 128>}]} {
    %c0 = arith.constant 0 : index
    %c0_0 = arith.constant 0 : index
    %0 = vector.load %arg1[%c0, %c0_0] : memref<128x128xf32, #tpu.memory_space<vmem>>, vector<128x128xf32>
    %cst = arith.constant dense<0.000000e+00> : vector<128xf32>
    %1 = vector.multi_reduction <add>, %0, %cst [1] : vector<128x128xf32> to vector<128xf32>
    %2 = vector.shape_cast %1 : vector<128xf32> to vector<128x1xf32>
    %cst_1 = arith.constant 1.280000e+02 : f32
    %3 = vector.broadcast %cst_1 : f32 to vector<128x1xf32>
    %4 = arith.divf %2, %3 : vector<128x1xf32>
    %5 = arith.mulf %0, %0 : vector<128x128xf32>
    %cst_2 = arith.constant dense<0.000000e+00> : vector<128xf32>
    %6 = vector.multi_reduction <add>, %5, %cst_2 [1] : vector<128x128xf32> to vector<128xf32>
    %7 = vector.shape_cast %6 : vector<128xf32> to vector<128x1xf32>
    %cst_3 = arith.constant 1.280000e+02 : f32
    %8 = vector.broadcast %cst_3 : f32 to vector<128x1xf32>
    %9 = arith.divf %7, %8 : vector<128x1xf32>
    %10 = arith.mulf %4, %4 : vector<128x1xf32>
    %11 = arith.subf %9, %10 : vector<128x1xf32>
    %cst_4 = arith.constant 0.000000e+00 : f32
    %12 = vector.broadcast %cst_4 : f32 to vector<128x1xf32>
    %13 = arith.maximumf %11, %12 : vector<128x1xf32>
    %cst_5 = arith.constant 9.99999974E-6 : f32
    %14 = vector.broadcast %cst_5 : f32 to vector<128x1xf32>
    %15 = arith.addf %13, %14 : vector<128x1xf32>
    %16 = math.rsqrt %15 : vector<128x1xf32>
    %17 = vector.broadcast %4 : vector<128x1xf32> to vector<128x128xf32>
    %18 = arith.subf %0, %17 : vector<128x128xf32>
    %19 = vector.broadcast %16 : vector<128x1xf32> to vector<128x128xf32>
    %20 = arith.mulf %18, %19 : vector<128x128xf32>
    %c0_6 = arith.constant 0 : index
    %c0_7 = arith.constant 0 : index
    %21 = vector.load %arg2[%c0_6, %c0_7] : memref<128x128xf32, #tpu.memory_space<vmem>>, vector<128x128xf32>
    %cst_8 = arith.constant dense<0.000000e+00> : vector<128x128xf32>
    %22 = tpu.matmul %20, %21, %cst_8 {dimension_numbers = #tpu.dot_dimension_numbers<[1], [0], [0], [1], [0, 0, 1, 1], [], []>} : vector<128x128xf32>, vector<128x128xf32>, vector<128x128xf32> -> vector<128x128xf32>
    %c0_9 = arith.constant 0 : index
    %c0_10 = arith.constant 0 : index
    %23 = vector.load %arg3[%c0_9, %c0_10] : memref<1x128xf32, #tpu.memory_space<vmem>>, vector<1x128xf32>
    %24 = vector.broadcast %23 : vector<1x128xf32> to vector<128x128xf32>
    %25 = arith.addf %22, %24 : vector<128x128xf32>
    %c0_11 = arith.constant 0 : index
    %c0_12 = arith.constant 0 : index
    %26 = vector.load %arg4[%c0_11, %c0_12] : memref<128x128xf32, #tpu.memory_space<vmem>>, vector<128x128xf32>
    tpu.vector_store %arg4[%c0_11, %c0_12], %25 {strides = array<i32>} : memref<128x128xf32, #tpu.memory_space<vmem>>, vector<128x128xf32>,
    return
  }
  func.func @transform_0(%arg0: i32) -> (i32, i32) {
    %c0_i32 = arith.constant 0 : i32
    %c0_i32_0 = arith.constant 0 : i32
    return %arg0, %c0_i32 : i32, i32
  }
  func.func @transform_1(%arg0: i32) -> (i32, i32) {
    %c0_i32 = arith.constant 0 : i32
    %c0_i32_0 = arith.constant 0 : i32
    %c0_i32_1 = arith.constant 0 : i32
    return %c0_i32, %c0_i32_0 : i32, i32
  }
  func.func @transform_2(%arg0: i32) -> (i32, i32) {
    %c0_i32 = arith.constant 0 : i32
    %c0_i32_0 = arith.constant 0 : i32
    %c0_i32_1 = arith.constant 0 : i32
    return %c0_i32, %c0_i32_0 : i32, i32
  }
  func.func @transform_3(%arg0: i32) -> (i32, i32) {
    %c0_i32 = arith.constant 0 : i32
    %c0_i32_0 = arith.constant 0 : i32
    return %arg0, %c0_i32 : i32, i32
  }
}

</mosaic_0001>

<llo_original>
// kernel: patch_merging_forward.1
$region0: #{patch_merging_forward.1}
  #allocation0 [shape = 'u32[]', space=smem, size = 0x4, offset = 0x4, fixed_abs, tag = 'smem constant byte address 0x4 - core index']
  #allocation1 [shape = 'u32[144,128]{1,0:T(1,128)}', space=vmem, size = 0x12000, scoped, tag = 'internal scratch']
  %s0 = inlined_call_operand.vmem [shape: f32[128,128], index: 0, kind: input, shape index: {}]
  %s1 = inlined_call_operand.vmem [shape: f32[128,128], index: 1, kind: input, shape index: {}]
  %s2 = inlined_call_operand.vmem [shape: f32[1,128], index: 2, kind: input, shape index: {}]
  %s3 = inlined_call_operand.hbm [shape: f32[128,128], index: 3, kind: output, shape index: {}]
  %s4 = sld [smem:[#allocation0]]
  $region22: #{patch_merging_forward.1} parent=0
    _
  %s6 = ssub.s32 1, %s4
  %s7 = scalar_select 0, %s6, %s4
  $region1: #{patch_merging_forward.1} parent=0
    #allocation2 [shape = 'u8[65536]{0}', space=vmem, size = 0x10000, scoped, tag = 'output window, operand 0, single buffered']
    #allocation3 [shape = 's32[1]{0}', space=sflag, size = 0x4, scoped, tag = 'scoped memory for patch_merging_forward.1']
    %8 = vsyncpa [#allocation3], 0
    // Predicated region
    $region2: #{patch_merging_forward.1} parent=1 // pred_check
      _
    $region3: #{patch_merging_forward.1} parent=1 // pred_check_branch
      %10 = sbr.rel (0) target = $region5
    $region4: #{patch_merging_forward.1} parent=1 // pred_region
      _
    $region5: #{patch_merging_forward.1} parent=1 // pred_fallthru
      _
    // Predicated region
    $region6: #{patch_merging_forward.1} parent=1 // pred_check
      _
    $region7: #{patch_merging_forward.1} parent=1 // pred_check_branch
      %12 = sbr.rel (0) target = $region9
    $region8: #{patch_merging_forward.1} parent=1 // pred_region
      _
    $region9: #{patch_merging_forward.1} parent=1 // pred_fallthru
      _
    // Predicated region
    $region10: #{patch_merging_forward.1} parent=1 // pred_check
      _
    $region11: #{patch_merging_forward.1} parent=1 // pred_check_branch
      %14 = sbr.rel (0) target = $region13
    $region12: #{patch_merging_forward.1} parent=1 // pred_region
      _
    $region13: #{patch_merging_forward.1} parent=1 // pred_fallthru
      _
    %v15 = vld [vmem:[%s0] sm:$0xff]
    %v16 = vld [vmem:[%s0 + $0x8] sm:$0xff]
    %v17 = vld [vmem:[%s0 + $0x10] sm:$0xff]
    %v18 = vld [vmem:[%s0 + $0x18] sm:$0xff]
    %v19 = vld [vmem:[%s0 + $0x20] sm:$0xff]
    %v20 = vld [vmem:[%s0 + $0x28] sm:$0xff]
    %v21 = vld [vmem:[%s0 + $0x30] sm:$0xff]
    %v22 = vld [vmem:[%s0 + $0x38] sm:$0xff]
    %v23 = vld [vmem:[%s0 + $0x40] sm:$0xff]
    %v24 = vld [vmem:[%s0 + $0x48] sm:$0xff]
    %v25 = vld [vmem:[%s0 + $0x50] sm:$0xff]
    %v26 = vld [vmem:[%s0 + $0x58] sm:$0xff]
    %v27 = vld [vmem:[%s0 + $0x60] sm:$0xff]
    %v28 = vld [vmem:[%s0 + $0x68] sm:$0xff]
    %v29 = vld [vmem:[%s0 + $0x70] sm:$0xff]
    %v30 = vld [vmem:[%s0 + $0x78] sm:$0xff]
    %31 = vadd.xlane.f32.xlu0 %v15
    %v32 = vpop.xlane.xlu0 %31
    %33 = vadd.xlane.f32.xlu0 %v16
    %v34 = vpop.xlane.xlu0 %33
    %35 = vadd.xlane.f32.xlu0 %v17
    %v36 = vpop.xlane.xlu0 %35
    %37 = vadd.xlane.f32.xlu0 %v18
    %v38 = vpop.xlane.xlu0 %37
    %39 = vadd.xlane.f32.xlu0 %v19
    %v40 = vpop.xlane.xlu0 %39
    %41 = vadd.xlane.f32.xlu0 %v20
    %v42 = vpop.xlane.xlu0 %41
    %43 = vadd.xlane.f32.xlu0 %v21
    %v44 = vpop.xlane.xlu0 %43
    %45 = vadd.xlane.f32.xlu0 %v22
    %v46 = vpop.xlane.xlu0 %45
    %47 = vadd.xlane.f32.xlu0 %v23
    %v48 = vpop.xlane.xlu0 %47
    %49 = vadd.xlane.f32.xlu0 %v24
    %v50 = vpop.xlane.xlu0 %49
    %51 = vadd.xlane.f32.xlu0 %v25
    %v52 = vpop.xlane.xlu0 %51
    %53 = vadd.xlane.f32.xlu0 %v26
    %v54 = vpop.xlane.xlu0 %53
    %55 = vadd.xlane.f32.xlu0 %v27
    %v56 = vpop.xlane.xlu0 %55
    %57 = vadd.xlane.f32.xlu0 %v28
    %v58 = vpop.xlane.xlu0 %57
    %59 = vadd.xlane.f32.xlu0 %v29
    %v60 = vpop.xlane.xlu0 %59
    %61 = vadd.xlane.f32.xlu0 %v30
    %v62 = vpop.xlane.xlu0 %61
    %v63 = vrcp.pop 128.0
    %v64 = vmul.f32 %v32, %v63
    %v65 = vmul.f32 %v34, %v63
    %v66 = vmul.f32 %v36, %v63
    %v67 = vmul.f32 %v38, %v63
    %v68 = vmul.f32 %v40, %v63
    %v69 = vmul.f32 %v42, %v63
    %v70 = vmul.f32 %v44, %v63
    %v71 = vmul.f32 %v46, %v63
    %v72 = vmul.f32 %v48, %v63
    %v73 = vmul.f32 %v50, %v63
    %v74 = vmul.f32 %v52, %v63
    %v75 = vmul.f32 %v54, %v63
    %v76 = vmul.f32 %v56, %v63
    %v77 = vmul.f32 %v58, %v63
    %v78 = vmul.f32 %v60, %v63
    %v79 = vmul.f32 %v62, %v63
    %v80 = vmul.f32 %v15, %v15
    %v81 = vmul.f32 %v16, %v16
    %v82 = vmul.f32 %v17, %v17
    %v83 = vmul.f32 %v18, %v18
    %v84 = vmul.f32 %v19, %v19
    %v85 = vmul.f32 %v20, %v20
    %v86 = vmul.f32 %v21, %v21
    %v87 = vmul.f32 %v22, %v22
    %v88 = vmul.f32 %v23, %v23
    %v89 = vmul.f32 %v24, %v24
    %v90 = vmul.f32 %v25, %v25
    %v91 = vmul.f32 %v26, %v26
    %v92 = vmul.f32 %v27, %v27
    %v93 = vmul.f32 %v28, %v28
    %v94 = vmul.f32 %v29, %v29
    %v95 = vmul.f32 %v30, %v30
    %96 = vadd.xlane.f32.xlu0 %v80
    %v97 = vpop.xlane.xlu0 %96
    %98 = vadd.xlane.f32.xlu0 %v81
    %v99 = vpop.xlane.xlu0 %98
    %100 = vadd.xlane.f32.xlu0 %v82
    %v101 = vpop.xlane.xlu0 %100
    %102 = vadd.xlane.f32.xlu0 %v83
    %v103 = vpop.xlane.xlu0 %102
    %104 = vadd.xlane.f32.xlu0 %v84
    %v105 = vpop.xlane.xlu0 %104
    %106 = vadd.xlane.f32.xlu0 %v85
    %v107 = vpop.xlane.xlu0 %106
    %108 = vadd.xlane.f32.xlu0 %v86
    %v109 = vpop.xlane.xlu0 %108
    %110 = vadd.xlane.f32.xlu0 %v87
    %v111 = vpop.xlane.xlu0 %110
    %112 = vadd.xlane.f32.xlu0 %v88
    %v113 = vpop.xlane.xlu0 %112
    %114 = vadd.xlane.f32.xlu0 %v89
    %v115 = vpop.xlane.xlu0 %114
    %116 = vadd.xlane.f32.xlu0 %v90
    %v117 = vpop.xlane.xlu0 %116
    %118 = vadd.xlane.f32.xlu0 %v91
    %v119 = vpop.xlane.xlu0 %118
    %120 = vadd.xlane.f32.xlu0 %v92
    %v121 = vpop.xlane.xlu0 %120
    %122 = vadd.xlane.f32.xlu0 %v93
    %v123 = vpop.xlane.xlu0 %122
    %124 = vadd.xlane.f32.xlu0 %v94
    %v125 = vpop.xlane.xlu0 %124
    %126 = vadd.xlane.f32.xlu0 %v95
    %v127 = vpop.xlane.xlu0 %126
    %v128 = vmul.f32 %v97, %v63
    %v129 = vmul.f32 %v99, %v63
    %v130 = vmul.f32 %v101, %v63
    %v131 = vmul.f32 %v103, %v63
    %v132 = vmul.f32 %v105, %v63
    %v133 = vmul.f32 %v107, %v63
    %v134 = vmul.f32 %v109, %v63
    %v135 = vmul.f32 %v111, %v63
    %v136 = vmul.f32 %v113, %v63
    %v137 = vmul.f32 %v115, %v63
    %v138 = vmul.f32 %v117, %v63
    %v139 = vmul.f32 %v119, %v63
    %v140 = vmul.f32 %v121, %v63
    %v141 = vmul.f32 %v123, %v63
    %v142 = vmul.f32 %v125, %v63
    %v143 = vmul.f32 %v127, %v63
    %v144 = vmul.f32 %v64, %v64
    %v145 = vmul.f32 %v65, %v65
    %v146 = vmul.f32 %v66, %v66
    %v147 = vmul.f32 %v67, %v67
    %v148 = vmul.f32 %v68, %v68
    %v149 = vmul.f32 %v69, %v69
    %v150 = vmul.f32 %v70, %v70
    %v151 = vmul.f32 %v71, %v71
    %v152 = vmul.f32 %v72, %v72
    %v153 = vmul.f32 %v73, %v73
    %v154 = vmul.f32 %v74, %v74
    %v155 = vmul.f32 %v75, %v75
    %v156 = vmul.f32 %v76, %v76
    %v157 = vmul.f32 %v77, %v77
    %v158 = vmul.f32 %v78, %v78
    %v159 = vmul.f32 %v79, %v79
    %v160 = vsub.f32 %v128, %v144
    %v161 = vsub.f32 %v129, %v145
    %v162 = vsub.f32 %v130, %v146
    %v163 = vsub.f32 %v131, %v147
    %v164 = vsub.f32 %v132, %v148
    %v165 = vsub.f32 %v133, %v149
    %v166 = vsub.f32 %v134, %v150
    %v167 = vsub.f32 %v135, %v151
    %v168 = vsub.f32 %v136, %v152
    %v169 = vsub.f32 %v137, %v153
    %v170 = vsub.f32 %v138, %v154
    %v171 = vsub.f32 %v139, %v155
    %v172 = vsub.f32 %v140, %v156
    %v173 = vsub.f32 %v141, %v157
    %v174 = vsub.f32 %v142, %v158
    %v175 = vsub.f32 %v143, %v159
    %v176 = vmax.f32 %v160, 0.0
    %v177 = vmax.f32 %v161, 0.0
    %v178 = vmax.f32 %v162, 0.0
    %v179 = vmax.f32 %v163, 0.0
    %v180 = vmax.f32 %v164, 0.0
    %v181 = vmax.f32 %v165, 0.0
    %v182 = vmax.f32 %v166, 0.0
    %v183 = vmax.f32 %v167, 0.0
    %v184 = vmax.f32 %v168, 0.0
    %v185 = vmax.f32 %v169, 0.0
    %v186 = vmax.f32 %v170, 0.0
    %v187 = vmax.f32 %v171, 0.0
    %v188 = vmax.f32 %v172, 0.0
    %v189 = vmax.f32 %v173, 0.0
    %v190 = vmax.f32 %v174, 0.0
    %v191 = vmax.f32 %v175, 0.0
    %v192 = vadd.f32 %v176, 1e-05
    %v193 = vadd.f32 %v177, 1e-05
    %v194 = vadd.f32 %v178, 1e-05
    %v195 = vadd.f32 %v179, 1e-05
    %v196 = vadd.f32 %v180, 1e-05
    %v197 = vadd.f32 %v181, 1e-05
    %v198 = vadd.f32 %v182, 1e-05
    %v199 = vadd.f32 %v183, 1e-05
    %v200 = vadd.f32 %v184, 1e-05
    %v201 = vadd.f32 %v185, 1e-05
    %v202 = vadd.f32 %v186, 1e-05
    %v203 = vadd.f32 %v187, 1e-05
    %v204 = vadd.f32 %v188, 1e-05
    %v205 = vadd.f32 %v189, 1e-05
    %v206 = vadd.f32 %v190, 1e-05
    %v207 = vadd.f32 %v191, 1e-05
    %v208 = vrsqrt.pop %v192
    %v209 = vrsqrt.pop %v193
    %v210 = vrsqrt.pop %v194
    %v211 = vrsqrt.pop %v195
    %v212 = vrsqrt.pop %v196
    %v213 = vrsqrt.pop %v197
    %v214 = vrsqrt.pop %v198
    %v215 = vrsqrt.pop %v199
    %v216 = vrsqrt.pop %v200
    %v217 = vrsqrt.pop %v201
    %v218 = vrsqrt.pop %v202
    %v219 = vrsqrt.pop %v203
    %v220 = vrsqrt.pop %v204
    %v221 = vrsqrt.pop %v205
    %v222 = vrsqrt.pop %v206
    %v223 = vrsqrt.pop %v207
    %v224 = vsub.f32 %v15, %v64
    %v225 = vsub.f32 %v16, %v65
    %v226 = vsub.f32 %v17, %v66
    %v227 = vsub.f32 %v18, %v67
    %v228 = vsub.f32 %v19, %v68
    %v229 = vsub.f32 %v20, %v69
    %v230 = vsub.f32 %v21, %v70
    %v231 = vsub.f32 %v22, %v71
    %v232 = vsub.f32 %v23, %v72
    %v233 = vsub.f32 %v24, %v73
    %v234 = vsub.f32 %v25, %v74
    %v235 = vsub.f32 %v26, %v75
    %v236 = vsub.f32 %v27, %v76
    %v237 = vsub.f32 %v28, %v77
    %v238 = vsub.f32 %v29, %v78
    %v239 = vsub.f32 %v30, %v79
    %v240 = vmul.f32 %v224, %v208
    %v241 = vmul.f32 %v225, %v209
    %v242 = vmul.f32 %v226, %v210
    %v243 = vmul.f32 %v227, %v211
    %v244 = vmul.f32 %v228, %v212
    %v245 = vmul.f32 %v229, %v213
    %v246 = vmul.f32 %v230, %v214
    %v247 = vmul.f32 %v231, %v215
    %v248 = vmul.f32 %v232, %v216
    %v249 = vmul.f32 %v233, %v217
    %v250 = vmul.f32 %v234, %v218
    %v251 = vmul.f32 %v235, %v219
    %v252 = vmul.f32 %v236, %v220
    %v253 = vmul.f32 %v237, %v221
    %v254 = vmul.f32 %v238, %v222
    %v255 = vmul.f32 %v239, %v223
    %v256 = vld [vmem:[%s1] sm:$0xff]
    %v257 = vld [vmem:[%s1 + $0x8] sm:$0xff]
    %v258 = vld [vmem:[%s1 + $0x10] sm:$0xff]
    %v259 = vld [vmem:[%s1 + $0x18] sm:$0xff]
    %v260 = vld [vmem:[%s1 + $0x20] sm:$0xff]
    %v261 = vld [vmem:[%s1 + $0x28] sm:$0xff]
    %v262 = vld [vmem:[%s1 + $0x30] sm:$0xff]
    %v263 = vld [vmem:[%s1 + $0x38] sm:$0xff]
    %v264 = vld [vmem:[%s1 + $0x40] sm:$0xff]
    %v265 = vld [vmem:[%s1 + $0x48] sm:$0xff]
    %v266 = vld [vmem:[%s1 + $0x50] sm:$0xff]
    %v267 = vld [vmem:[%s1 + $0x58] sm:$0xff]
    %v268 = vld [vmem:[%s1 + $0x60] sm:$0xff]
    %v269 = vld [vmem:[%s1 + $0x68] sm:$0xff]
    %v270 = vld [vmem:[%s1 + $0x70] sm:$0xff]
    %v271 = vld [vmem:[%s1 + $0x78] sm:$0xff]
    %v272 = vld [vmem:[%s2] sm:$0x1]
    %v274 = vlaneseq
    %v275 = vshrl.u32 %v274, 7
    %v276 = vsub.s32 0, %v275
    %v277 = vrot.slane %v272, %v276
    %279 = vmatprep.subr.mxu0 0.0
    %280 = vmatpush1.msra.mxu0 %v256
    %281 = vmatprep.subr.mxu0 0.0
    %282 = vmatpush1.msra.mxu0 %v257
    %283 = vmatprep.subr.mxu0 0.0
    %284 = vmatpush1.msra.mxu0 %v258
    %285 = vmatprep.subr.mxu0 0.0
    %286 = vmatpush1.msra.mxu0 %v259
    %287 = vmatprep.subr.mxu0 0.0
    %288 = vmatpush1.msra.mxu0 %v260
    %289 = vmatprep.subr.mxu0 0.0
    %290 = vmatpush1.msra.mxu0 %v261
    %291 = vmatprep.subr.mxu0 0.0
    %292 = vmatpush1.msra.mxu0 %v262
    %293 = vmatprep.subr.mxu0 0.0
    %294 = vmatpush1.msra.mxu0 %v263
    %295 = vmatprep.subr.mxu0 0.0
    %296 = vmatpush1.msra.mxu0 %v264
    %297 = vmatprep.subr.mxu0 0.0
    %298 = vmatpush1.msra.mxu0 %v265
    %299 = vmatprep.subr.mxu0 0.0
    %300 = vmatpush1.msra.mxu0 %v266
    %301 = vmatprep.subr.mxu0 0.0
    %302 = vmatpush1.msra.mxu0 %v267
    %303 = vmatprep.subr.mxu0 0.0
    %304 = vmatpush1.msra.mxu0 %v268
    %305 = vmatprep.subr.mxu0 0.0
    %306 = vmatpush1.msra.mxu0 %v269
    %307 = vmatprep.subr.mxu0 0.0
    %308 = vmatpush1.msra.mxu0 %v270
    %309 = vmatprep.subr.mxu0 0.0
    %310 = vmatpush1.msra.mxu0 %v271
    %311 = vmatprep.subr.mxu0 0.0
    %312 = vmatpush1.msra.mxu0 0.0
    %313 = vmatprep.subr.mxu0 0.0
    %314 = vmatpush1.msra.mxu0 0.0
    %315 = vmatprep.subr.mxu0 0.0
    %316 = vmatpush1.msra.mxu0 0.0
    %317 = vmatprep.subr.mxu0 0.0
    %318 = vmatpush1.msra.mxu0 0.0
    %319 = vmatprep.subr.mxu0 0.0
    %320 = vmatpush1.msra.mxu0 0.0
    %321 = vmatprep.subr.mxu0 0.0
    %322 = vmatpush1.msra.mxu0 0.0
    %323 = vmatprep.subr.mxu0 0.0
    %324 = vmatpush1.msra.mxu0 0.0
    %325 = vmatprep.subr.mxu0 0.0
    %326 = vmatpush1.msra.mxu0 0.0
    %327 = vmatprep.subr.mxu0 0.0
    %328 = vmatpush1.msra.mxu0 0.0
    %329 = vmatprep.subr.mxu0 0.0
    %330 = vmatpush1.msra.mxu0 0.0
    %331 = vmatprep.subr.mxu0 0.0
    %332 = vmatpush1.msra.mxu0 0.0
    %333 = vmatprep.subr.mxu0 0.0
    %334 = vmatpush1.msra.mxu0 0.0
    %335 = vmatprep.subr.mxu0 0.0
    %336 = vmatpush1.msra.mxu0 0.0
    %337 = vmatprep.subr.mxu0 0.0
    %338 = vmatpush1.msra.mxu0 0.0
    %339 = vmatprep.subr.mxu0 0.0
    %340 = vmatpush1.msra.mxu0 0.0
    %341 = vmatprep.subr.mxu0 0.0
    %342 = vmatpush1.msra.mxu0 0.0
    %343 = vmatprep.mubr.f32.mxu0 0.0
    %344 = vmatmul.mubr.f32.gmra.mrb[0].mxu0 %v240
    %v345 = vpop.f32.mrb[0].mxu0
    %v346 = vadd.f32 %v277, %v345
    %v347 = vpop.f32.mrb[0].mxu0
    %348 = vmatprep.mubr.f32.mxu0 0.0
    %349 = vmatmul.mubr.f32.gmra.mrb[0].mxu0 %v241
    %v350 = vpop.f32.mrb[0].mxu0
    %v351 = vadd.f32 %v277, %v350
    %v352 = vpop.f32.mrb[0].mxu0
    %353 = vmatprep.mubr.f32.mxu0 0.0
    %354 = vmatmul.mubr.f32.gmra.mrb[0].mxu0 %v242
    %v355 = vpop.f32.mrb[0].mxu0
    %v356 = vadd.f32 %v277, %v355
    %v357 = vpop.f32.mrb[0].mxu0
    %358 = vmatprep.mubr.f32.mxu0 0.0
    %359 = vmatmul.mubr.f32.gmra.mrb[0].mxu0 %v243
    %v360 = vpop.f32.mrb[0].mxu0
    %v361 = vadd.f32 %v277, %v360
    %v362 = vpop.f32.mrb[0].mxu0
    %363 = vmatprep.mubr.f32.mxu0 0.0
    %364 = vmatmul.mubr.f32.gmra.mrb[0].mxu0 %v244
    %v365 = vpop.f32.mrb[0].mxu0
    %v366 = vadd.f32 %v277, %v365
    %v367 = vpop.f32.mrb[0].mxu0
    %368 = vmatprep.mubr.f32.mxu0 0.0
    %369 = vmatmul.mubr.f32.gmra.mrb[0].mxu0 %v245
    %v370 = vpop.f32.mrb[0].mxu0
    %v371 = vadd.f32 %v277, %v370
    %v372 = vpop.f32.mrb[0].mxu0
    %373 = vmatprep.mubr.f32.mxu0 0.0
    %374 = vmatmul.mubr.f32.gmra.mrb[0].mxu0 %v246
    %v375 = vpop.f32.mrb[0].mxu0
    %v376 = vadd.f32 %v277, %v375
    %v377 = vpop.f32.mrb[0].mxu0
    %378 = vmatprep.mubr.f32.mxu0 0.0
    %379 = vmatmul.mubr.f32.gmra.mrb[0].mxu0 %v247
    %v380 = vpop.f32.mrb[0].mxu0
    %v381 = vadd.f32 %v277, %v380
    %v382 = vpop.f32.mrb[0].mxu0
    %383 = vmatprep.mubr.f32.mxu0 0.0
    %384 = vmatmul.mubr.f32.gmra.mrb[0].mxu0 %v248
    %v385 = vpop.f32.mrb[0].mxu0
    %v386 = vadd.f32 %v277, %v385
    %v387 = vpop.f32.mrb[0].mxu0
    %388 = vmatprep.mubr.f32.mxu0 0.0
    %389 = vmatmul.mubr.f32.gmra.mrb[0].mxu0 %v249
    %v390 = vpop.f32.mrb[0].mxu0
    %v391 = vadd.f32 %v277, %v390
    %v392 = vpop.f32.mrb[0].mxu0
    %393 = vmatprep.mubr.f32.mxu0 0.0
    %394 = vmatmul.mubr.f32.gmra.mrb[0].mxu0 %v250
    %v395 = vpop.f32.mrb[0].mxu0
    %v396 = vadd.f32 %v277, %v395
    %v397 = vpop.f32.mrb[0].mxu0
    %398 = vmatprep.mubr.f32.mxu0 0.0
    %399 = vmatmul.mubr.f32.gmra.mrb[0].mxu0 %v251
    %v400 = vpop.f32.mrb[0].mxu0
    %v401 = vadd.f32 %v277, %v400
    %v402 = vpop.f32.mrb[0].mxu0
    %403 = vmatprep.mubr.f32.mxu0 0.0
    %404 = vmatmul.mubr.f32.gmra.mrb[0].mxu0 %v252
    %v405 = vpop.f32.mrb[0].mxu0
    %v406 = vadd.f32 %v277, %v405
    %v407 = vpop.f32.mrb[0].mxu0
    %408 = vmatprep.mubr.f32.mxu0 0.0
    %409 = vmatmul.mubr.f32.gmra.mrb[0].mxu0 %v253
    %v410 = vpop.f32.mrb[0].mxu0
    %v411 = vadd.f32 %v277, %v410
    %v412 = vpop.f32.mrb[0].mxu0
    %413 = vmatprep.mubr.f32.mxu0 0.0
    %414 = vmatmul.mubr.f32.gmra.mrb[0].mxu0 %v254
    %v415 = vpop.f32.mrb[0].mxu0
    %v416 = vadd.f32 %v277, %v415
    %v417 = vpop.f32.mrb[0].mxu0
    %418 = vmatprep.mubr.f32.mxu0 0.0
    %419 = vmatmul.mubr.f32.gmra.mrb[0].mxu0 %v255
    %v420 = vpop.f32.mrb[0].mxu0
    %v421 = vadd.f32 %v277, %v420
    %v422 = vpop.f32.mrb[0].mxu0
    %423 = vdwg.mxu0
    %424 = vst [vmem:[#allocation2] sm:$0xff] %v346
    %425 = vst [vmem:[#allocation2 + $0x8] sm:$0xff] %v351
    %426 = vst [vmem:[#allocation2 + $0x10] sm:$0xff] %v356
    %427 = vst [vmem:[#allocation2 + $0x18] sm:$0xff] %v361
    %428 = vst [vmem:[#allocation2 + $0x20] sm:$0xff] %v366
    %429 = vst [vmem:[#allocation2 + $0x28] sm:$0xff] %v371
    %430 = vst [vmem:[#allocation2 + $0x30] sm:$0xff] %v376
    %431 = vst [vmem:[#allocation2 + $0x38] sm:$0xff] %v381
    %432 = vst [vmem:[#allocation2 + $0x40] sm:$0xff] %v386
    %433 = vst [vmem:[#allocation2 + $0x48] sm:$0xff] %v391
    %434 = vst [vmem:[#allocation2 + $0x50] sm:$0xff] %v396
    %435 = vst [vmem:[#allocation2 + $0x58] sm:$0xff] %v401
    %436 = vst [vmem:[#allocation2 + $0x60] sm:$0xff] %v406
    %437 = vst [vmem:[#allocation2 + $0x68] sm:$0xff] %v411
    %438 = vst [vmem:[#allocation2 + $0x70] sm:$0xff] %v416
    %439 = vst [vmem:[#allocation2 + $0x78] sm:$0xff] %v421
    // Predicated region
    $region14: #{patch_merging_forward.1} parent=1 // pred_check
      _
    $region15: #{patch_merging_forward.1} parent=1 // pred_check_branch
      %441 = sbr.rel (0) target = $region17
    $region16: #{patch_merging_forward.1} parent=1 // pred_region
      %s443 = ssub.s32 2048, 2048
      %444 = vsyncadd [#allocation3], %s443
      %s445 = sshll.u32 [#allocation2], 4
      %s446 = int_to_ptr.vmem [resolvable:$true] %s445
      %451 = dma.vmem_to_hbm [thread:$0]  %s446, 2048, %s3, [#allocation3], 128, 128, 8
    $region17: #{patch_merging_forward.1} parent=1 // pred_fallthru
      _
    // Predicated region
    $region18: #{patch_merging_forward.1} parent=1 // pred_check
      _
    $region19: #{patch_merging_forward.1} parent=1 // pred_check_branch
      %453 = sbr.rel (0) target = $region21
    $region20: #{patch_merging_forward.1} parent=1 // pred_region
      %454 = dma.done [#allocation3], 2048
    $region21: #{patch_merging_forward.1} parent=1 // pred_fallthru
      _
    %455 = vsyncpa [#allocation3], 1

</llo_original>
